<compile_context>
chip_gen: v5e
topology: v5e:2x2
jax: 0.10.0
libtpu: 0.0.40
codegen_flags: <defaults>
</compile_context>

<pallas_src>
import functools

import jax
import jax.numpy as jnp
from jax.experimental import pallas as pl
from jax.experimental.pallas import tpu as pltpu


# ----------------------------- kernel bodies ------------------------------ #

def _hswish_epilogue(y_f32, shift, out_dtype):
    # BN shift then Hswish: y * relu6(y+3)/6 == y * clip(y/6 + 0.5, 0, 1).
    y = y_f32 + shift
    return (y * jnp.clip(y * (1.0 / 6.0) + 0.5, 0.0, 1.0)).astype(out_dtype)


def _conv_bn_hswish_kernel(x_ref, w_ref, shift_ref, o_ref, *, compute_dtype):
    # x_ref: (C1, T) native dtype, w_ref: (C2, C1) compute dtype (BN scale
    # pre-folded), shift_ref: (C2, 1) f32, o_ref: (C2, T).
    x = x_ref[...].astype(compute_dtype)          # in-kernel cast (VPU filler)
    y = jnp.dot(w_ref[...], x, preferred_element_type=jnp.float32)
    o_ref[...] = _hswish_epilogue(y, shift_ref[...], o_ref.dtype)


def _conv_bn_hswish_ksplit_kernel(x_ref, w_ref, shift_ref, o_ref, acc_ref, *,
                                  compute_dtype):
    # Grid = (n, hw_tiles, k_tiles); K axis last + "arbitrary".
    k = pl.program_id(2)

    @pl.when(k == 0)
    def _():
        acc_ref[...] = jnp.zeros_like(acc_ref)

    x = x_ref[...].astype(compute_dtype)
    acc_ref[...] += jnp.dot(w_ref[...], x, preferred_element_type=jnp.float32)

    @pl.when(k == pl.num_programs(2) - 1)
    def _():
        o_ref[...] = _hswish_epilogue(acc_ref[...], shift_ref[...], o_ref.dtype)


# ------------------------------ wrapper ------------------------------------ #

def _const_block_spec(shape, resident_bytes):
    """BlockSpec for a grid-invariant operand; single-buffer it when large."""
    zeros = (0,) * len(shape)
    index_map = lambda *_: zeros
    if resident_bytes >= (256 << 10) and hasattr(pl, "Buffered"):
        try:
            return pl.BlockSpec(shape, index_map, pipeline_mode=pl.Buffered(1))
        except TypeError:  # older BlockSpec without pipeline_mode
            pass
    return pl.BlockSpec(shape, index_map)


def _xla_fallback(x_nchw, w2d_f32, shift_f32, compute_dtype, out_dtype):
    # Small / lane-sparse FPN levels: let XLA fuse it (avoids masked stores).
    c2 = w2d_f32.shape[0]
    y = jnp.einsum("oc,nchw->nohw",
                   w2d_f32.astype(compute_dtype),
                   x_nchw.astype(compute_dtype),
                   preferred_element_type=jnp.float32)
    y = y + shift_f32.reshape(1, c2, 1, 1)
    y = y * jnp.clip(y * (1.0 / 6.0) + 0.5, 0.0, 1.0)
    return y.astype(out_dtype)


def conv_bn_hswish(x_nchw, weight, gamma, beta, running_mean, running_var,
                   eps=1e-3, *, out_dtype=None, compute_dtype=jnp.bfloat16,
                   t_hw=None, max_tk=1024):
    """Fused 1x1 conv (bias=False) + BatchNorm2d (inference) + Hswish.

    x_nchw: (N, C1, H, W); weight: (C2, C1, 1, 1) PyTorch OIHW layout.
    out_dtype: output dtype (default: x dtype). compute_dtype: MXU stream
    dtype for activations/weights (default bf16; pass jnp.float32 for full
    precision). max_tk: contraction tile bound; C1 > max_tk triggers a K-split
    grid axis with an f32 VMEM accumulator.
    """
    n, c1, h, w = x_nchw.shape
    c2 = weight.shape[0]
    hw = h * w
    out_dtype = x_nchw.dtype if out_dtype is None else out_dtype

    # Fold BN (inference) into the conv weights and a per-channel shift.
    inv_std = 1.0 / jnp.sqrt(running_var.astype(jnp.float32) + eps)
    scale = gamma.astype(jnp.float32) * inv_std                       # (C2,)
    shift = beta.astype(jnp.float32) - running_mean.astype(jnp.float32) * scale
    w2d = weight[:, :, 0, 0].astype(jnp.float32) * scale[:, None]     # (C2, C1)

    if hw % 128 != 0:
        # Lane-sparse output blocks -> masked vst.msk stores + tiny DMA bursts.
        return _xla_fallback(x_nchw, w2d, shift, compute_dtype, out_dtype)

    # Kernel path. x stays NCHW viewed as (N, C1, HW): lane axis = spatial,
    # final reshape back to (N, C2, H, W) is a free contiguous reshape.
    # (Tiny C1/C2 still work correctly, just with low MXU utilization.)
    x3d = x_nchw.reshape(n, c1, hw)                 # native dtype, no HBM copy
    wck = w2d.astype(compute_dtype)                 # (C2, C1), tiny cast
    shift2d = shift.reshape(c2, 1)                  # (C2, 1) f32

    x_bytes = jnp.dtype(x3d.dtype).itemsize
    o_bytes = jnp.dtype(out_dtype).itemsize
    w_bytes = jnp.dtype(compute_dtype).itemsize

    # Generation-aware VMEM budget (v7x: 64 MiB, v5e/v6e: 128 MiB physical).
    try:
        vmem_cap = int(pltpu.get_tpu_info().vmem_capacity_bytes)
    except Exception:  # conservative default if the query is unavailable
        vmem_cap = 64 << 20
    budget = int(0.6 * vmem_cap)

    # Contraction (K) tiling: only split when C1 is large, and only with a
    # tile that divides C1 exactly (no padded garbage in the accumulator).
    tk = c1
    if max_tk is not None and c1 > max_tk:
        for cand in (512, 256, 128):
            if cand <= max_tk and c1 % cand == 0:
                tk = cand
                break
    k_steps = c1 // tk
    k_split = k_steps > 1

    # Spatial tile: largest multiple of 128 whose working set fits ~half the
    # VMEM budget (bigger tiles on 128 MiB parts, smaller on v7x's 64 MiB).
    if t_hw is None:
        acc_row_bytes = c2 * 4 if k_split else 0
        fixed = 2 * c2 * tk * w_bytes + 2 * c2 * 4
        t_hw = 128
        for cand in (8192, 4096, 2048, 1024, 512, 256, 128):
            if cand > hw:
                continue
            per_step = (2 * tk * cand * x_bytes       # double-buffered x block
                        + 2 * c2 * cand * o_bytes     # double-buffered out block
                        + cand * acc_row_bytes)       # f32 accumulator
            if per_step + fixed <= budget // 2:
                t_hw = cand
                break
    t_hw = min(t_hw, hw)

    need = (2 * tk * t_hw * x_bytes + 2 * c2 * t_hw * o_bytes
            + 2 * c2 * tk * w_bytes + 2 * c2 * 4
            + (c2 * t_hw * 4 if k_split else 0))
    vmem_limit = int(min(max(need + (4 << 20), 8 << 20), budget))
    vmem_limit = max(vmem_limit, need + (2 << 20))

    cost = pl.CostEstimate(
        flops=2 * n * hw * c1 * c2,
        transcendentals=0,
        bytes_accessed=(x3d.size * x_bytes + wck.size * w_bytes
                        + shift2d.size * 4 + n * c2 * hw * o_bytes),
    )

    w_resident = c2 * c1 * w_bytes
    if not k_split:
        kernel = functools.partial(_conv_bn_hswish_kernel,
                                   compute_dtype=compute_dtype)
        grid = (n, pl.cdiv(hw, t_hw))
        in_specs = [
            pl.BlockSpec((None, c1, t_hw), lambda b, j: (b, 0, j)),
            _const_block_spec((c2, c1), w_resident),
            _const_block_spec((c2, 1), c2 * 4),
        ]
        out_specs = pl.BlockSpec((None, c2, t_hw), lambda b, j: (b, 0, j))
        scratch_shapes = []
        dim_sem = ("parallel", "parallel")
    else:
        kernel = functools.partial(_conv_bn_hswish_ksplit_kernel,
                                   compute_dtype=compute_dtype)
        grid = (n, pl.cdiv(hw, t_hw), k_steps)
        in_specs = [
            pl.BlockSpec((None, tk, t_hw), lambda b, j, k: (b, k, j)),
            pl.BlockSpec((c2, tk), lambda b, j, k: (0, k)),
            _const_block_spec((c2, 1), c2 * 4),
        ]
        out_specs = pl.BlockSpec((None, c2, t_hw), lambda b, j, k: (b, 0, j))
        scratch_shapes = [pltpu.VMEM((c2, t_hw), jnp.float32)]
        dim_sem = ("parallel", "parallel", "arbitrary")

    out3d = pl.pallas_call(
        kernel,
        out_shape=jax.ShapeDtypeStruct((n, c2, hw), out_dtype),
        grid_spec=pltpu.PrefetchScalarGridSpec(
            num_scalar_prefetch=0,
            grid=grid,
            in_specs=in_specs,
            out_specs=out_specs,
            scratch_shapes=scratch_shapes,
        ),
        compiler_params=pltpu.CompilerParams(
            dimension_semantics=dim_sem,
            vmem_limit_bytes=vmem_limit),
        cost_estimate=cost,
    )(x3d, wck, shift2d)

    # (N, C2, HW) -> (N, C2, H, W): contiguous reshape, no transpose.
    return out3d.reshape(n, c2, h, w)


# ------------------------------ reference ---------------------------------- #

def _reference(x_nchw, weight, gamma, beta, running_mean, running_var, eps=1e-3):
    y = jax.lax.conv_general_dilated(
        x_nchw, weight, window_strides=(1, 1), padding="VALID",
        dimension_numbers=("NCHW", "OIHW", "NCHW"))
    s = (gamma / jnp.sqrt(running_var + eps)).reshape(1, -1, 1, 1)
    b = (beta - running_mean * gamma / jnp.sqrt(running_var + eps)).reshape(1, -1, 1, 1)
    y = y * s + b
    return y * jnp.clip(y + 3.0, 0.0, 6.0) / 6.0


def _make_inputs(key, n, c1, c2, h, w, w_scale):
    k_x, k_w, k_g, k_b = jax.random.split(key, 4)
    x = jax.random.normal(k_x, (n, c1, h, w), dtype=jnp.float32)
    weight = jax.random.normal(k_w, (c2, c1, 1, 1), dtype=jnp.float32) * w_scale
    gamma = jax.random.normal(k_g, (c2,), dtype=jnp.float32) * 0.1 + 1.0
    beta = jax.random.normal(k_b, (c2,), dtype=jnp.float32) * 0.1
    running_mean = jnp.zeros((c2,), dtype=jnp.float32)
    running_var = jnp.ones((c2,), dtype=jnp.float32)
    return x, weight, gamma, beta, running_mean, running_var


if __name__ == "__main__":
    key = jax.random.PRNGKey(0)
    k1, k2, k3 = jax.random.split(key, 3)

    # 1) Primary small case (Pallas single-K path): N=2, C1=4, C2=8, 16x16.
    args1 = _make_inputs(k1, 2, 4, 8, 16, 16, w_scale=0.1)
    out1 = jax.block_until_ready(conv_bn_hswish(*args1))
    ref1 = _reference(*args1)
    assert out1.shape == (2, 8, 16, 16)
    assert jnp.allclose(out1, ref1, atol=5e-2, rtol=5e-2), float(
        jnp.max(jnp.abs(out1 - ref1)))

    # 2) K-split path (forced via max_tk): C1=256 split into 2 K tiles of 128,
    #    bf16 output dtype knob exercised.
    args2 = _make_inputs(k2, 1, 256, 128, 16, 16, w_scale=0.02)
    out2 = jax.block_until_ready(
        conv_bn_hswish(*args2, out_dtype=jnp.bfloat16, max_tk=128))
    ref2 = _reference(*args2)
    assert out2.shape == (1, 128, 16, 16) and out2.dtype == jnp.bfloat16
    assert jnp.allclose(out2.astype(jnp.float32), ref2, atol=5e-2, rtol=5e-2), \
        float(jnp.max(jnp.abs(out2.astype(jnp.float32) - ref2)))

    # 3) Lane-sparse spatial extent (7x7 -> HW=49): fused XLA fallback path.
    args3 = _make_inputs(k3, 2, 4, 8, 7, 7, w_scale=0.1)
    out3 = jax.block_until_ready(conv_bn_hswish(*args3))
    ref3 = _reference(*args3)
    assert out3.shape == (2, 8, 7, 7)
    assert jnp.allclose(out3, ref3, atol=5e-2, rtol=5e-2), float(
        jnp.max(jnp.abs(out3 - ref3)))

    print("KERNEL_OK")
</pallas_src>

<mosaic_0001>
module attributes {stable_mosaic.version = 11 : i64} {
  func.func @_conv_bn_hswish_kernel(%arg0: i32, %arg1: i32, %arg2: memref<1x4x256xf32, #tpu.memory_space<vmem>>, %arg3: memref<8x4xbf16, #tpu.memory_space<vmem>>, %arg4: memref<8x1xf32, #tpu.memory_space<vmem>>, %arg5: memref<1x8x256xf32, #tpu.memory_space<vmem>>) attributes {dimension_semantics = [#tpu.dimension_semantics<parallel>, #tpu.dimension_semantics<parallel>], iteration_bounds = array<i64: 2, 1>, scalar_prefetch = 0 : i64, scratch_operands = 0 : i64, tpu.core_type = #tpu.core_type<tc>, window_params = [{transform_indices = @transform_0, window_bounds = array<i64: 1, 4, 256>}, {pipeline_mode = #tpu.pipeline_mode<synchronous>, transform_indices = @transform_1, window_bounds = array<i64: 8, 4>}, {pipeline_mode = #tpu.pipeline_mode<synchronous>, transform_indices = @transform_2, window_bounds = array<i64: 8, 1>}, {transform_indices = @transform_3, window_bounds = array<i64: 1, 8, 256>}]} {
    %c0 = arith.constant 0 : index
    %c0_0 = arith.constant 0 : index
    %c0_1 = arith.constant 0 : index
    %0 = vector.load %arg2[%c0, %c0_0, %c0_1] : memref<1x4x256xf32, #tpu.memory_space<vmem>>, vector<1x4x256xf32>
    %1 = vector.shape_cast %0 : vector<1x4x256xf32> to vector<4x256xf32>
    %2 = arith.truncf %1 : vector<4x256xf32> to vector<4x256xbf16>
    %c0_2 = arith.constant 0 : index
    %c0_3 = arith.constant 0 : index
    %3 = vector.load %arg3[%c0_2, %c0_3] : memref<8x4xbf16, #tpu.memory_space<vmem>>, vector<8x4xbf16>
    %cst = arith.constant dense<0.000000e+00> : vector<8x256xf32>
    %4 = tpu.matmul %3, %2, %cst {dimension_numbers = #tpu.dot_dimension_numbers<[1], [0], [0], [1], [0, 0, 1, 1], [], []>} : vector<8x4xbf16>, vector<4x256xbf16>, vector<8x256xf32> -> vector<8x256xf32>
    %c0_4 = arith.constant 0 : index
    %c0_5 = arith.constant 0 : index
    %5 = vector.load %arg4[%c0_4, %c0_5] : memref<8x1xf32, #tpu.memory_space<vmem>>, vector<8x1xf32>
    %6 = vector.broadcast %5 : vector<8x1xf32> to vector<8x256xf32>
    %7 = arith.addf %4, %6 : vector<8x256xf32>
    %cst_6 = arith.constant 0.166666672 : f32
    %8 = vector.broadcast %cst_6 : f32 to vector<8x256xf32>
    %9 = arith.mulf %7, %8 : vector<8x256xf32>
    %cst_7 = arith.constant 5.000000e-01 : f32
    %10 = vector.broadcast %cst_7 : f32 to vector<8x256xf32>
    %11 = arith.addf %9, %10 : vector<8x256xf32>
    %cst_8 = arith.constant 0.000000e+00 : f32
    %cst_9 = arith.constant 1.000000e+00 : f32
    %12 = vector.broadcast %cst_8 : f32 to vector<8x256xf32>
    %13 = arith.maximumf %12, %11 : vector<8x256xf32>
    %14 = vector.broadcast %cst_9 : f32 to vector<8x256xf32>
    %15 = arith.minimumf %14, %13 : vector<8x256xf32>
    %16 = arith.mulf %7, %15 : vector<8x256xf32>
    %c0_10 = arith.constant 0 : index
    %c0_11 = arith.constant 0 : index
    %c0_12 = arith.constant 0 : index
    %17 = vector.load %arg5[%c0_10, %c0_11, %c0_12] : memref<1x8x256xf32, #tpu.memory_space<vmem>>, vector<1x8x256xf32>
    %18 = vector.shape_cast %17 : vector<1x8x256xf32> to vector<8x256xf32>
    %19 = vector.shape_cast %16 : vector<8x256xf32> to vector<1x8x256xf32>
    tpu.vector_store %arg5[%c0_10, %c0_11, %c0_12], %19 {strides = array<i32>} : memref<1x8x256xf32, #tpu.memory_space<vmem>>, vector<1x8x256xf32>,
    return
  }
  func.func @transform_0(%arg0: i32, %arg1: i32) -> (i32, i32, i32) {
    %c0_i32 = arith.constant 0 : i32
    %c0_i32_0 = arith.constant 0 : i32
    return %arg0, %c0_i32, %arg1 : i32, i32, i32
  }
  func.func @transform_1(%arg0: i32, %arg1: i32) -> (i32, i32) {
    %c0_i32 = arith.constant 0 : i32
    %c0_i32_0 = arith.constant 0 : i32
    %c0_i32_1 = arith.constant 0 : i32
    return %c0_i32, %c0_i32_0 : i32, i32
  }
  func.func @transform_2(%arg0: i32, %arg1: i32) -> (i32, i32) {
    %c0_i32 = arith.constant 0 : i32
    %c0_i32_0 = arith.constant 0 : i32
    %c0_i32_1 = arith.constant 0 : i32
    return %c0_i32, %c0_i32_0 : i32, i32
  }
  func.func @transform_3(%arg0: i32, %arg1: i32) -> (i32, i32, i32) {
    %c0_i32 = arith.constant 0 : i32
    %c0_i32_0 = arith.constant 0 : i32
    return %arg0, %c0_i32, %arg1 : i32, i32, i32
  }
}

</mosaic_0001>

<llo_original>
// kernel: tpu_custom_call.1
$region0: #{tpu_custom_call.1}
  #allocation0 [shape = 'u32[]', space=smem, size = 0x4, offset = 0x4, fixed_abs, tag = 'smem constant byte address 0x4 - core index']
  #allocation1 [shape = 'u32[72,128]{1,0:T(1,128)}', space=vmem, size = 0x9000, scoped, tag = 'internal scratch']
  %s0 = inlined_call_operand.hbm [shape: f32[2,4,256], index: 0, kind: input, shape index: {}]
  %s1 = inlined_call_operand.vmem [shape: bf16[8,4], index: 1, kind: input, shape index: {}]
  %s2 = inlined_call_operand.vmem [shape: f32[8,1], index: 2, kind: input, shape index: {}]
  %s3 = inlined_call_operand.hbm [shape: f32[2,8,256], index: 3, kind: output, shape index: {}]
  %s4 = sld [smem:[#allocation0]]
  $region49: #{tpu_custom_call.1} parent=0
    _
  %s6 = ssub.s32 1, %s4
  %s7 = scalar_select 0, %s6, %s4
  $region1: #{tpu_custom_call.1} parent=0
    #allocation2 [shape = 'u8[8192]{0}', space=vmem, size = 0x2000, scoped, tag = 'input window, operand 0']
    #allocation3 [shape = 's32[2]{0}', space=sflag, size = 0x8, scoped, tag = 'scoped memory for tpu_custom_call.1']
    #allocation4 [shape = 's32[2]{0}', space=sflag, size = 0x8, scoped, tag = 'scoped memory for tpu_custom_call.1']
    #allocation5 [shape = 'u8[16384]{0}', space=vmem, size = 0x4000, scoped, tag = 'output window, operand 0']
    %8 = vsyncpa [#allocation3], 0
    %s9 = scalar_lea.sflag [#allocation3], 1
    %10 = vsyncpa %s9, 0
    %11 = vsyncpa [#allocation4], 0
    %s12 = scalar_lea.sflag [#allocation4], 1
    %13 = vsyncpa %s12, 0
    loop: start=0, step=1, limit=4
    $region2: #{tpu_custom_call.1} parent=1 // loop_pre_header
      _
    $region3: #{tpu_custom_call.1} parent=1 // loop_header
      %s15 = sphi 0, %s19
      %p16 = scmp.ge.s32.totalorder %s15, 4
      %s22 = sphi 0, %s34
      %s23 = sphi 0, %s30
      %s24 = sphi 0, %s22
      %s25 = sphi 0, %s23
      %s26 = sphi 0, %s24
      %s27 = sphi 0, %s25
      %s39 = sphi 0, %s41
      %s42 = sphi 0, %s39
      %s43 = sphi 0, %s42
      %s59 = sphi 0, %s43
      %s63 = sphi 0, %s63
      %s65 = sphi 0, %s63
      %s66 = sphi 0, %s65
      %s80 = sphi 0, %s66
      %s84 = sphi 0, %s84
      %s86 = sphi 0, %s84
      %s87 = sphi 0, %s86
      %s101 = sphi 0, %s87
      %s109 = sphi 0, %s111
      %s112 = sphi 0, %s109
      %s113 = sphi 0, %s112
      %s129 = sphi 0, %s113
    $region4: #{tpu_custom_call.1} parent=1 // loop_header_branch
      %18 = sbr.rel (%p16) target = $region8
    $region5: #{tpu_custom_call.1} parent=1 // loop_body
      %s20 = ssub.s32 %s15, 1
      %s21 = ssub.s32 %s15, 2
      %s28 = sadd.s32 1, %s23
      %p29 = scmp.ge.s32.totalorder %s28, 1
      %s30 = scalar_select %p29, 0, %s28
      %s31 = sadd.s32 1, %s22
      %s32 = scalar_select %p29, %s31, %s22
      %p33 = scmp.ge.s32.totalorder %s32, 2
      %s34 = scalar_select %p33, 0, %s32
      %s35 = ssub.s32 %s22, %s34
      %s36 = ssub.s32 %s23, %s30
      %s37 = sor.u32 %s35, %s36
      %p38 = scmp.eq.s32.totalorder %s37, 0
      %s40 = sadd.s32 %s39, 1
      %s41 = scalar_select %p38, %s39, %s40
      %p44 = pneg %p38
      %p45 = scmp.eq.s32.totalorder %s15, 1
      %p46 = por %p44, %p45
      %p47 = scmp.ne.s32.totalorder %s39, %s42
      %p48 = scmp.eq.s32.totalorder %s15, 0
      %p49 = por %p47, %p48
      %p50 = scmp.ne.s32.totalorder %s39, %s42
      %p51 = scmp.eq.s32.totalorder %s20, 1
      %p52 = por %p50, %p51
      %p53 = scmp.ne.s32.totalorder %s42, %s43
      %p54 = scmp.eq.s32.totalorder %s20, 0
      %p55 = por %p53, %p54
      %p56 = scmp.ne.s32.totalorder %s42, %s43
      %p57 = scmp.eq.s32.totalorder %s21, 1
      %p58 = por %p56, %p57
      %p60 = scmp.ne.s32.totalorder %s43, %s59
      %p61 = scmp.eq.s32.totalorder %s21, 0
      %p62 = por %p60, %p61
      %s64 = sadd.s32 %s63, 1
      %p67 = scmp.eq.s32.totalorder %s15, 1
      %p68 = scmp.ne.s32.totalorder %s63, %s65
      %p69 = scmp.eq.s32.totalorder %s15, 0
      %p70 = por %p68, %p69
      %p71 = scmp.ne.s32.totalorder %s63, %s65
      %p72 = scmp.eq.s32.totalorder %s20, 1
      %p73 = por %p71, %p72
      %p74 = scmp.ne.s32.totalorder %s65, %s66
      %p75 = scmp.eq.s32.totalorder %s20, 0
      %p76 = por %p74, %p75
      %p77 = scmp.ne.s32.totalorder %s65, %s66
      %p78 = scmp.eq.s32.totalorder %s21, 1
      %p79 = por %p77, %p78
      %p81 = scmp.ne.s32.totalorder %s66, %s80
      %p82 = scmp.eq.s32.totalorder %s21, 0
      %p83 = por %p81, %p82
      %s85 = sadd.s32 %s84, 1
      %p88 = scmp.eq.s32.totalorder %s15, 1
      %p89 = scmp.ne.s32.totalorder %s84, %s86
      %p90 = scmp.eq.s32.totalorder %s15, 0
      %p91 = por %p89, %p90
      %p92 = scmp.ne.s32.totalorder %s84, %s86
      %p93 = scmp.eq.s32.totalorder %s20, 1
      %p94 = por %p92, %p93
      %p95 = scmp.ne.s32.totalorder %s86, %s87
      %p96 = scmp.eq.s32.totalorder %s20, 0
      %p97 = por %p95, %p96
      %p98 = scmp.ne.s32.totalorder %s86, %s87
      %p99 = scmp.eq.s32.totalorder %s21, 1
      %p100 = por %p98, %p99
      %p102 = scmp.ne.s32.totalorder %s87, %s101
      %p103 = scmp.eq.s32.totalorder %s21, 0
      %p104 = por %p102, %p103
      %s105 = ssub.s32 %s22, %s34
      %s106 = ssub.s32 %s23, %s30
      %s107 = sor.u32 %s105, %s106
      %p108 = scmp.eq.s32.totalorder %s107, 0
      %s110 = sadd.s32 %s109, 1
      %s111 = scalar_select %p108, %s109, %s110
      %p114 = pneg %p108
      %p115 = scmp.eq.s32.totalorder %s15, 1
      %p116 = por %p114, %p115
      %p117 = scmp.ne.s32.totalorder %s109, %s112
      %p118 = scmp.eq.s32.totalorder %s15, 0
      %p119 = por %p117, %p118
      %p120 = scmp.ne.s32.totalorder %s109, %s112
      %p121 = scmp.eq.s32.totalorder %s20, 1
      %p122 = por %p120, %p121
      %p123 = scmp.ne.s32.totalorder %s112, %s113
      %p124 = scmp.eq.s32.totalorder %s20, 0
      %p125 = por %p123, %p124
      %p126 = scmp.ne.s32.totalorder %s112, %s113
      %p127 = scmp.eq.s32.totalorder %s21, 1
      %p128 = por %p126, %p127
      %p130 = scmp.ne.s32.totalorder %s113, %s129
      %p131 = scmp.eq.s32.totalorder %s21, 0
      %p132 = por %p130, %p131
      %p133 = scmp.le.s32.totalorder 1, %s15
      %p134 = scmp.lt.s32.totalorder %s15, 3
      %p135 = pnand %p133, %p134
      %p136 = pneg %p135
      // Predicated region
      $region9: #{tpu_custom_call.1} parent=5 // pred_check
        _
      $region10: #{tpu_custom_call.1} parent=5 // pred_check_branch
        %138 = sbr.rel (%p135) target = $region12
      $region11: #{tpu_custom_call.1} parent=5 // pred_region
        %s139 = ssub.s32 %s15, 1
        // Predicated region
        $region13: #{tpu_custom_call.1} parent=11 // pred_check
          %p140 = pneg %p76
        $region14: #{tpu_custom_call.1} parent=11 // pred_check_branch
          %142 = sbr.rel (%p140) target = $region16
        $region15: #{tpu_custom_call.1} parent=11 // pred_region
          _
        $region16: #{tpu_custom_call.1} parent=11 // pred_fallthru
          _
        // Predicated region
        $region17: #{tpu_custom_call.1} parent=11 // pred_check
          %p143 = pneg %p97
        $region18: #{tpu_custom_call.1} parent=11 // pred_check_branch
          %145 = sbr.rel (%p143) target = $region20
        $region19: #{tpu_custom_call.1} parent=11 // pred_region
          _
        $region20: #{tpu_custom_call.1} parent=11 // pred_fallthru
          _
      $region12: #{tpu_custom_call.1} parent=5 // pred_fallthru
        _
      %p146 = scmp.lt.s32.totalorder %s15, 2
      // Predicated region
      $region21: #{tpu_custom_call.1} parent=5 // pred_check
        %p147 = pneg %p146
      $region22: #{tpu_custom_call.1} parent=5 // pred_check_branch
        %149 = sbr.rel (%p147) target = $region24
      $region23: #{tpu_custom_call.1} parent=5 // pred_region
        // Predicated region
        $region25: #{tpu_custom_call.1} parent=23 // pred_check
          %p150 = pneg %p49
        $region26: #{tpu_custom_call.1} parent=23 // pred_check_branch
          %152 = sbr.rel (%p150) target = $region28
        $region27: #{tpu_custom_call.1} parent=23 // pred_region
          %s153 = sand.u32 %s39, 1
          %s154 = scalar_lea.sflag [#allocation3], %s153
          %s155 = sand.u32 %s39, 1
          %s156 = smul.addr %s155, 8
          %s157 = scalar_lea.vmem [#allocation2], %s156
          %s158 = smul.u32 2, %s23
          %160 = vsyncadd %s154, 0
          %s161 = smul.addr %s22, 2
          %s162 = sadd.s32 %s158, %s161
          %s163 = smul.addr %s162, 4
          %s164 = scalar_lea.hbm %s0, %s163
          %s166 = sshll.u32 %s164, 4
          %s167 = int_to_ptr.hbm [resolvable:$true] %s166
          %s168 = sshll.u32 %s157, 4
          %s169 = int_to_ptr.vmem [resolvable:$true] %s168
          %171 = dma.hbm_to_vmem [thread:$0]  %s167, 128, %s169, %s154
        $region28: #{tpu_custom_call.1} parent=23 // pred_fallthru
          _
      $region24: #{tpu_custom_call.1} parent=5 // pred_fallthru
        _
      %p172 = scmp.le.s32.totalorder 1, %s15
      %p173 = scmp.lt.s32.totalorder %s15, 3
      %p174 = pnand %p172, %p173
      %p175 = pneg %p174
      // Predicated region
      $region29: #{tpu_custom_call.1} parent=5 // pred_check
        _
      $region30: #{tpu_custom_call.1} parent=5 // pred_check_branch
        %177 = sbr.rel (%p174) target = $region32
      $region31: #{tpu_custom_call.1} parent=5 // pred_region
        %s178 = ssub.s32 %s15, 1
        %s179 = sand.u32 %s42, 1
        %s180 = scalar_lea.sflag [#allocation3], %s179
        %s181 = sand.u32 %s42, 1
        %s182 = smul.addr %s181, 8
        %s183 = scalar_lea.vmem [#allocation2], %s182
        // Predicated region
        $region33: #{tpu_custom_call.1} parent=31 // pred_check
          %p184 = pneg %p55
        $region34: #{tpu_custom_call.1} parent=31 // pred_check_branch
          %186 = sbr.rel (%p184) target = $region36
        $region35: #{tpu_custom_call.1} parent=31 // pred_region
          %188 = dma.done %s180, 128
        $region36: #{tpu_custom_call.1} parent=31 // pred_fallthru
          _
        %s189 = sand.u32 %s42, 1
        %s190 = scalar_lea.sflag [#allocation3], %s189
        %s191 = sand.u32 %s42, 1
        %s192 = smul.addr %s191, 8
        %s193 = scalar_lea.vmem [#allocation2], %s192
        %p194 = pneg %p55
        %p195 = pneg %p52
        %p196 = pneg %p76
        %p197 = pneg %p73
        %p198 = pneg %p97
        %p199 = pneg %p94
        %p200 = pneg %p125
        %p201 = pneg %p122
        %s202 = sand.u32 %s112, 1
        %s203 = scalar_lea.sflag [#allocation4], %s202
        %s204 = sand.u32 %s112, 1
        %s205 = smul.addr %s204, 16
        %s206 = scalar_lea.vmem [#allocation5], %s205
        %s207 = smul.u32 2, %s25
        %s208 = smul.u32 2, %s25
        %v210 = vld [vmem:[%s183] sm:$0xff]
        %212 = vst [vmem:[#allocation1] ss:$2 sm:$0xff] %v210
        %v213 = vld.sshfl [vmem:[#allocation1] sm:$0xff pattern:$0x75316420]
        %v214 = vld.sshfl [vmem:[#allocation1 + $0x8] sm:$0xff pattern:$0x75316420]
        %v217 = vpack.c.bf16 %v213, %v213
        %v218 = vpack.c.bf16 %v214, %v214
        %v219 = vld [vmem:[%s1] sm:$0xf]
        %v220 = vld [vmem:[%s2] sm:$0xff]
        %222 = vset.pattern.permute.xlu0 0
        %223 = vperm.xlu0 %222, %v220
        %v224 = vpop.permute.xlu0 %223
        %vm226 = vcmask 31744
        %v228 = vsel %vm226, %v219, 0
        %vm230 = vcmask 1041408
        %v232 = vsel %vm230, %v217, 0
        %v235 = vsel %vm230, %v218, 0
        %237 = vmatpush.bf16.msra.mxu0 0
        %238 = vmatpush.bf16.msra.mxu0 0
        %239 = vmatpush.bf16.msra.mxu0 0
        %240 = vmatpush.bf16.msra.mxu0 0
        %241 = vmatpush.bf16.msra.mxu0 0
        %242 = vmatpush.bf16.msra.mxu0 0
        %243 = vmatpush.bf16.msra.mxu0 0
        %244 = vmatpush.bf16.msra.mxu0 %v232
        %245 = vmatmul.bf16.gmra.mxu0 %v228
        %v246 = vpop.f32.mrf.mxu0
        %v247 = vadd.f32 %v224, %v246
        %v248 = vpop.f32.mrf.mxu0
        %249 = vdwg.mxu0
        %250 = vmatpush.bf16.msra.mxu0 0
        %251 = vmatpush.bf16.msra.mxu0 0
        %252 = vmatpush.bf16.msra.mxu0 0
        %253 = vmatpush.bf16.msra.mxu0 0
        %254 = vmatpush.bf16.msra.mxu0 0
        %255 = vmatpush.bf16.msra.mxu0 0
        %256 = vmatpush.bf16.msra.mxu0 0
        %257 = vmatpush.bf16.msra.mxu0 %v235
        %258 = vmatmul.bf16.gmra.mxu0 %v228
        %v259 = vpop.f32.mrf.mxu0
        %v260 = vadd.f32 %v224, %v259
        %v261 = vpop.f32.mrf.mxu0
        %262 = vdwg.mxu0
        %v263 = vmul.f32 %v247, 0.16666667
        %v264 = vmul.f32 %v260, 0.16666667
        %v265 = vadd.f32 %v263, 0.5
        %v266 = vadd.f32 %v264, 0.5
        %v267 = vmax.f32 %v265, 0.0
        %v268 = vmax.f32 %v266, 0.0
        %v269 = vmin.f32 %v267, 1.0
        %v270 = vmin.f32 %v268, 1.0
        %v271 = vmul.f32 %v247, %v269
        %v272 = vmul.f32 %v260, %v270
        %273 = vst [vmem:[%s206] sm:$0xff] %v271
        %274 = vst [vmem:[%s206 + $0x8] sm:$0xff] %v272
        %s275 = sand.u32 %s112, 1
        %s276 = scalar_lea.sflag [#allocation4], %s275
        %s277 = sand.u32 %s112, 1
        %s278 = smul.addr %s277, 16
        %s279 = scalar_lea.vmem [#allocation5], %s278
        // Predicated region
        $region37: #{tpu_custom_call.1} parent=31 // pred_check
          %p280 = pneg %p122
        $region38: #{tpu_custom_call.1} parent=31 // pred_check_branch
          %282 = sbr.rel (%p280) target = $region40
        $region39: #{tpu_custom_call.1} parent=31 // pred_region
          %s283 = smul.u32 2, %s25
          %285 = vsyncadd %s276, 0
          %s286 = smul.addr %s24, 2
          %s287 = sadd.s32 %s283, %s286
          %s288 = smul.addr %s287, 8
          %s289 = scalar_lea.hbm %s3, %s288
          %s291 = sshll.u32 %s279, 4
          %s292 = int_to_ptr.vmem [resolvable:$true] %s291
          %s293 = sshll.u32 %s289, 4
          %s294 = int_to_ptr.hbm [resolvable:$true] %s293
          %296 = dma.vmem_to_hbm [thread:$0]  %s292, 256, %s294, %s276
        $region40: #{tpu_custom_call.1} parent=31 // pred_fallthru
          _
      $region32: #{tpu_custom_call.1} parent=5 // pred_fallthru
        _
      %p297 = scmp.le.s32.totalorder 2, %s15
      // Predicated region
      $region41: #{tpu_custom_call.1} parent=5 // pred_check
        %p298 = pneg %p297
      $region42: #{tpu_custom_call.1} parent=5 // pred_check_branch
        %300 = sbr.rel (%p298) target = $region44
      $region43: #{tpu_custom_call.1} parent=5 // pred_region
        %s301 = ssub.s32 %s15, 2
        // Predicated region
        $region45: #{tpu_custom_call.1} parent=43 // pred_check
          %p302 = pneg %p128
        $region46: #{tpu_custom_call.1} parent=43 // pred_check_branch
          %304 = sbr.rel (%p302) target = $region48
        $region47: #{tpu_custom_call.1} parent=43 // pred_region
          %s305 = sand.u32 %s113, 1
          %s306 = scalar_lea.sflag [#allocation4], %s305
          %s307 = sand.u32 %s113, 1
          %s308 = smul.addr %s307, 16
          %s309 = scalar_lea.vmem [#allocation5], %s308
          %311 = dma.done %s306, 256
        $region48: #{tpu_custom_call.1} parent=43 // pred_fallthru
          _
      $region44: #{tpu_custom_call.1} parent=5 // pred_fallthru
        _
    $region6: #{tpu_custom_call.1} parent=1 // loop_footer
      %s19 = sadd.s32 1, %s15
    $region7: #{tpu_custom_call.1} parent=1 // loop_footer_branch
      %14 = sbr.rel target = $region3
    $region8: #{tpu_custom_call.1} parent=1 // loop_exit
      _
    %312 = vsyncpa [#allocation3], 1
    %s313 = scalar_lea.sflag [#allocation3], 1
    %314 = vsyncpa %s313, 1
    %315 = vsyncpa [#allocation4], 1
    %s316 = scalar_lea.sflag [#allocation4], 1
    %317 = vsyncpa %s316, 1

</llo_original>
